<compile_context>
chip_gen: v7x
topology: tpu7x:2x2x1
jax: 0.10.0
libtpu: 0.0.40
codegen_flags: <defaults>
</compile_context>

<pallas_src>
import functools
import math

import jax
import jax.numpy as jnp
import numpy as np
from jax.experimental import pallas as pl
from jax.experimental.pallas import tpu as pltpu


def circle_loss_kernel(x_ref, w_ref, tgt_ref, o_ref, *, margin, scale, batch):
    # (1e-12)^2 guard on the sum of squares == F.normalize's max(||v||, eps).
    eps2 = jnp.float32(1e-24)

    x = x_ref[...].astype(jnp.float32)        # (B, D)
    w = w_ref[...].astype(jnp.float32)        # (C, D) raw prototypes

    # Prototype rows L2-normalized in-kernel: lane reduce + EUP rsqrt + VPU mul.
    w_inv = jax.lax.rsqrt(
        jnp.maximum(jnp.sum(w * w, axis=-1, keepdims=True), eps2))        # (C,1)
    wn = w * w_inv                                                         # (C,D)

    # (B,D) x (C,D)^T on the MXU; the transposed-RHS handling is one XLU vxpose
    # on a single tile.
    sim_raw = jax.lax.dot_general(
        x, wn, dimension_numbers=(((1,), (1,)), ((), ())),
        preferred_element_type=jnp.float32)                               # (B,C)

    # Row (x) normalization applied after the matmul: the sumsq/rsqrt chain
    # overlaps with the MXU instead of gating the vmatmul push.
    x_inv = jax.lax.rsqrt(
        jnp.maximum(jnp.sum(x * x, axis=-1, keepdims=True), eps2))        # (B,1)
    sim = sim_raw * x_inv                                                  # (B,C)

    B, C = sim.shape
    tgt = tgt_ref[...]                                   # (B, 1) int32
    col_ids = jax.lax.broadcasted_iota(jnp.int32, (B, C), 1)
    one_hot = col_ids == tgt                             # one True per row

    # sp: similarity at the target class -> (B, 1)
    sp = jnp.sum(jnp.where(one_hot, sim, 0.0), axis=-1, keepdims=True)

    delta_p = jnp.float32(1.0 - margin)
    delta_n = jnp.float32(margin)

    ap = jnp.maximum(-sp + 1.0 + margin, 0.0)
    lse_p = -ap * (sp - delta_p) * scale                 # (B,1); 1-elem logsumexp is exact

    an = jnp.maximum(sim + margin, 0.0)
    logit_n = an * (sim - delta_n) * scale               # (B, C)
    # mask out the target column before the logsumexp (== gathering sn)
    logit_n = jnp.where(one_hot, jnp.float32(-1e30), logit_n)
    m = jnp.max(logit_n, axis=-1, keepdims=True)
    lse_n = m + jnp.log(jnp.sum(jnp.exp(logit_n - m), axis=-1, keepdims=True))

    z = lse_n + lse_p                                    # (B, 1)
    # numerically stable softplus(z) = max(z, 0) + log1p(exp(-|z|))
    loss = jnp.maximum(z, 0.0) + jnp.log1p(jnp.exp(-jnp.abs(z)))

    # mean over batch as a sublane reduction -> (1, 1) output tile
    o_ref[...] = jnp.sum(loss, axis=0, keepdims=True) * jnp.float32(1.0 / batch)


@functools.partial(jax.jit, static_argnames=("margin", "scale"))
def circle_classifier(x, id_agent, target, margin, scale):
    B, D = x.shape
    C, _ = id_agent.shape

    # Tiny target prep kept here but fused under the jit (single dispatch);
    # everything else (weight norm, transpose) now lives inside the kernel.
    tgt = target.reshape(B, 1).astype(jnp.int32)

    kernel = functools.partial(circle_loss_kernel, margin=float(margin),
                               scale=float(scale), batch=B)
    out = pl.pallas_call(
        kernel,
        out_shape=jax.ShapeDtypeStruct((1, 1), jnp.float32),
        in_specs=[pl.BlockSpec(memory_space=pltpu.MemorySpace.VMEM),
                  pl.BlockSpec(memory_space=pltpu.MemorySpace.VMEM),
                  pl.BlockSpec(memory_space=pltpu.MemorySpace.VMEM)],
        out_specs=pl.BlockSpec(memory_space=pltpu.MemorySpace.VMEM),
    )(x, id_agent, tgt)
    return out[0, 0]


def circle_classifier_ref(x, id_agent, target, margin, scale):
    """Pure-JAX reference mirroring the PyTorch forward."""
    eps = 1e-12
    xn = x / jnp.maximum(jnp.linalg.norm(x, axis=1, keepdims=True), eps)
    wn = id_agent / jnp.maximum(jnp.linalg.norm(id_agent, axis=1, keepdims=True), eps)
    sim = xn @ wn.T                                      # (B, C)
    B, C = sim.shape
    one_hot = jax.nn.one_hot(target, C, dtype=bool)      # (B, C)
    sp = jnp.sum(jnp.where(one_hot, sim, 0.0), axis=1, keepdims=True)
    ap = jnp.maximum(-sp + 1.0 + margin, 0.0)
    an = jnp.maximum(sim + margin, 0.0)
    logit_p = -ap * (sp - (1.0 - margin)) * scale        # (B, 1)
    logit_n = an * (sim - margin) * scale                # (B, C)
    logit_n = jnp.where(one_hot, -jnp.inf, logit_n)      # drop target column
    z = (jax.scipy.special.logsumexp(logit_n, axis=1)
         + jax.scipy.special.logsumexp(logit_p, axis=1))
    return jnp.mean(jax.nn.softplus(z))


if __name__ == "__main__":
    B, D, C = 8, 32, 16          # batch, feature_dim, class_num
    margin, scale = 0.25, 64.0   # cfg.margin, cfg.scale

    key = jax.random.PRNGKey(0)
    k1, k2, k3 = jax.random.split(key, 3)
    x = jax.random.normal(k1, (B, D), dtype=jnp.float32)

    # deterministic xavier_uniform_ init for id_agent (C, D): fan_in=D, fan_out=C
    bound = math.sqrt(6.0 / (C + D))
    id_agent = jax.random.uniform(k2, (C, D), minval=-bound, maxval=bound,
                                  dtype=jnp.float32)
    target = jax.random.randint(k3, (B,), 0, C)

    loss = circle_classifier(x, id_agent, target, margin, scale)
    jax.block_until_ready(loss)

    ref = circle_classifier_ref(x, id_agent, target, margin, scale)
    np.testing.assert_allclose(np.asarray(loss), np.asarray(ref),
                               rtol=1e-4, atol=1e-4)
    print("KERNEL_OK")
</pallas_src>

<mosaic_0001>
module attributes {stable_mosaic.version = 11 : i64} {
  func.func @circle_loss_kernel(%arg0: memref<8x32xf32, #tpu.memory_space<vmem>>, %arg1: memref<16x32xf32, #tpu.memory_space<vmem>>, %arg2: memref<8x1xi32, #tpu.memory_space<vmem>>, %arg3: memref<1x1xf32, #tpu.memory_space<vmem>>) attributes {dimension_semantics = [], scalar_prefetch = 0 : i64, scratch_operands = 0 : i64, tpu.core_type = #tpu.core_type<tc>} {
    %c0 = arith.constant 0 : index
    %c0_0 = arith.constant 0 : index
    %0 = vector.load %arg0[%c0, %c0_0] : memref<8x32xf32, #tpu.memory_space<vmem>>, vector<8x32xf32>
    %c0_1 = arith.constant 0 : index
    %c0_2 = arith.constant 0 : index
    %1 = vector.load %arg1[%c0_1, %c0_2] : memref<16x32xf32, #tpu.memory_space<vmem>>, vector<16x32xf32>
    %2 = arith.mulf %1, %1 : vector<16x32xf32>
    %cst = arith.constant dense<0.000000e+00> : vector<16xf32>
    %3 = vector.multi_reduction <add>, %2, %cst [1] : vector<16x32xf32> to vector<16xf32>
    %4 = vector.shape_cast %3 : vector<16xf32> to vector<16x1xf32>
    %cst_3 = arith.constant 1.000000e-24 : f32
    %5 = vector.broadcast %cst_3 : f32 to vector<16x1xf32>
    %6 = arith.maximumf %4, %5 : vector<16x1xf32>
    %7 = math.rsqrt %6 : vector<16x1xf32>
    %8 = vector.broadcast %7 : vector<16x1xf32> to vector<16x32xf32>
    %9 = arith.mulf %1, %8 : vector<16x32xf32>
    %cst_4 = arith.constant dense<0.000000e+00> : vector<8x16xf32>
    %10 = tpu.matmul %0, %9, %cst_4 {dimension_numbers = #tpu.dot_dimension_numbers<[1], [1], [0], [0], [0, 0, 1, 0], [], []>} : vector<8x32xf32>, vector<16x32xf32>, vector<8x16xf32> -> vector<8x16xf32>
    %11 = arith.mulf %0, %0 : vector<8x32xf32>
    %cst_5 = arith.constant dense<0.000000e+00> : vector<8xf32>
    %12 = vector.multi_reduction <add>, %11, %cst_5 [1] : vector<8x32xf32> to vector<8xf32>
    %13 = vector.shape_cast %12 : vector<8xf32> to vector<8x1xf32>
    %cst_6 = arith.constant 1.000000e-24 : f32
    %14 = vector.broadcast %cst_6 : f32 to vector<8x1xf32>
    %15 = arith.maximumf %13, %14 : vector<8x1xf32>
    %16 = math.rsqrt %15 : vector<8x1xf32>
    %17 = vector.broadcast %16 : vector<8x1xf32> to vector<8x16xf32>
    %18 = arith.mulf %10, %17 : vector<8x16xf32>
    %c0_7 = arith.constant 0 : index
    %c0_8 = arith.constant 0 : index
    %19 = vector.load %arg2[%c0_7, %c0_8] : memref<8x1xi32, #tpu.memory_space<vmem>>, vector<8x1xi32>
    %20 = tpu.iota {dimensions = array<i32: 1>} : vector<8x16xi32>
    %21 = vector.broadcast %19 : vector<8x1xi32> to vector<8x16xi32>
    %22 = arith.cmpi eq, %20, %21 : vector<8x16xi32>
    %cst_9 = arith.constant 0.000000e+00 : f32
    %23 = vector.broadcast %cst_9 : f32 to vector<8x16xf32>
    %24 = arith.select %22, %18, %23 : vector<8x16xi1>, vector<8x16xf32>
    %cst_10 = arith.constant dense<0.000000e+00> : vector<8xf32>
    %25 = vector.multi_reduction <add>, %24, %cst_10 [1] : vector<8x16xf32> to vector<8xf32>
    %26 = vector.shape_cast %25 : vector<8xf32> to vector<8x1xf32>
    %cst_11 = arith.constant 0.000000e+00 : f32
    %27 = vector.broadcast %cst_11 : f32 to vector<8x1xf32>
    %28 = arith.subf %27, %26 : vector<8x1xf32>
    %cst_12 = arith.constant 1.000000e+00 : f32
    %29 = vector.broadcast %cst_12 : f32 to vector<8x1xf32>
    %30 = arith.addf %28, %29 : vector<8x1xf32>
    %cst_13 = arith.constant 2.500000e-01 : f32
    %31 = vector.broadcast %cst_13 : f32 to vector<8x1xf32>
    %32 = arith.addf %30, %31 : vector<8x1xf32>
    %cst_14 = arith.constant 0.000000e+00 : f32
    %33 = vector.broadcast %cst_14 : f32 to vector<8x1xf32>
    %34 = arith.maximumf %32, %33 : vector<8x1xf32>
    %cst_15 = arith.constant 0.000000e+00 : f32
    %35 = vector.broadcast %cst_15 : f32 to vector<8x1xf32>
    %36 = arith.subf %35, %34 : vector<8x1xf32>
    %cst_16 = arith.constant 7.500000e-01 : f32
    %37 = vector.broadcast %cst_16 : f32 to vector<8x1xf32>
    %38 = arith.subf %26, %37 : vector<8x1xf32>
    %39 = arith.mulf %36, %38 : vector<8x1xf32>
    %cst_17 = arith.constant 6.400000e+01 : f32
    %40 = vector.broadcast %cst_17 : f32 to vector<8x1xf32>
    %41 = arith.mulf %39, %40 : vector<8x1xf32>
    %cst_18 = arith.constant 2.500000e-01 : f32
    %42 = vector.broadcast %cst_18 : f32 to vector<8x16xf32>
    %43 = arith.addf %18, %42 : vector<8x16xf32>
    %cst_19 = arith.constant 0.000000e+00 : f32
    %44 = vector.broadcast %cst_19 : f32 to vector<8x16xf32>
    %45 = arith.maximumf %43, %44 : vector<8x16xf32>
    %cst_20 = arith.constant 2.500000e-01 : f32
    %46 = vector.broadcast %cst_20 : f32 to vector<8x16xf32>
    %47 = arith.subf %18, %46 : vector<8x16xf32>
    %48 = arith.mulf %45, %47 : vector<8x16xf32>
    %cst_21 = arith.constant 6.400000e+01 : f32
    %49 = vector.broadcast %cst_21 : f32 to vector<8x16xf32>
    %50 = arith.mulf %48, %49 : vector<8x16xf32>
    %cst_22 = arith.constant -1.000000e+30 : f32
    %51 = vector.broadcast %cst_22 : f32 to vector<8x16xf32>
    %52 = arith.select %22, %51, %50 : vector<8x16xi1>, vector<8x16xf32>
    %cst_23 = arith.constant dense<0xFF800000> : vector<8xf32>
    %53 = vector.multi_reduction <maximumf>, %52, %cst_23 [1] : vector<8x16xf32> to vector<8xf32>
    %54 = vector.shape_cast %53 : vector<8xf32> to vector<8x1xf32>
    %55 = vector.broadcast %54 : vector<8x1xf32> to vector<8x16xf32>
    %56 = arith.subf %52, %55 : vector<8x16xf32>
    %57 = math.exp %56 : vector<8x16xf32>
    %cst_24 = arith.constant dense<0.000000e+00> : vector<8xf32>
    %58 = vector.multi_reduction <add>, %57, %cst_24 [1] : vector<8x16xf32> to vector<8xf32>
    %59 = vector.shape_cast %58 : vector<8xf32> to vector<8x1xf32>
    %60 = math.log %59 : vector<8x1xf32>
    %61 = arith.addf %54, %60 : vector<8x1xf32>
    %62 = arith.addf %61, %41 : vector<8x1xf32>
    %cst_25 = arith.constant 0.000000e+00 : f32
    %63 = vector.broadcast %cst_25 : f32 to vector<8x1xf32>
    %64 = arith.maximumf %62, %63 : vector<8x1xf32>
    %65 = math.absf %62 : vector<8x1xf32>
    %cst_26 = arith.constant 0.000000e+00 : f32
    %66 = vector.broadcast %cst_26 : f32 to vector<8x1xf32>
    %67 = arith.subf %66, %65 : vector<8x1xf32>
    %68 = math.exp %67 : vector<8x1xf32>
    %69 = math.log1p %68 : vector<8x1xf32>
    %70 = arith.addf %64, %69 : vector<8x1xf32>
    %cst_27 = arith.constant dense<0.000000e+00> : vector<1xf32>
    %71 = vector.multi_reduction <add>, %70, %cst_27 [0] : vector<8x1xf32> to vector<1xf32>
    %72 = vector.shape_cast %71 : vector<1xf32> to vector<1x1xf32>
    %cst_28 = arith.constant 1.250000e-01 : f32
    %73 = vector.broadcast %cst_28 : f32 to vector<1x1xf32>
    %74 = arith.mulf %72, %73 : vector<1x1xf32>
    %c0_29 = arith.constant 0 : index
    %c0_30 = arith.constant 0 : index
    %75 = vector.load %arg3[%c0_29, %c0_30] : memref<1x1xf32, #tpu.memory_space<vmem>>, vector<1x1xf32>
    tpu.vector_store %arg3[%c0_29, %c0_30], %74 {strides = array<i32>} : memref<1x1xf32, #tpu.memory_space<vmem>>, vector<1x1xf32>,
    return
  }
}

</mosaic_0001>

<llo_original>
// kernel: circle_classifier.1
$region0: #{circle_classifier.1}
  #allocation0 [shape = 'u32[]', space=smem, size = 0x4, offset = 0x4, fixed_abs, tag = 'smem constant byte address 0x4 - core index']
  #allocation1 [shape = 'u32[144,128]{1,0:T(1,128)}', space=vmem, size = 0x12000, scoped, tag = 'internal scratch']
  %s0 = inlined_call_operand.hbm [shape: f32[8,32], index: 0, kind: input, shape index: {}]
  %s1 = inlined_call_operand.vmem [shape: f32[16,32], index: 1, kind: input, shape index: {}]
  %s2 = inlined_call_operand.vmem [shape: s32[8,1], index: 2, kind: input, shape index: {}]
  %s3 = inlined_call_operand.hbm [shape: f32[1,1], index: 3, kind: output, shape index: {}]
  %s4 = sld [smem:[#allocation0]]
  $region26: #{circle_classifier.1} parent=0
    _
  %s6 = ssub.s32 1, %s4
  %s7 = scalar_select 0, %s6, %s4
  $region1: #{circle_classifier.1} parent=0
    #allocation2 [shape = 'u8[4096]{0}', space=vmem, size = 0x1000, scoped, tag = 'input window, operand 0, single buffered']
    #allocation3 [shape = 's32[1]{0}', space=sflag, size = 0x4, scoped, tag = 'scoped memory for circle_classifier.1']
    #allocation4 [shape = 's32[1]{0}', space=sflag, size = 0x4, scoped, tag = 'scoped memory for circle_classifier.1']
    #allocation5 [shape = 'u8[512]{0}', space=vmem, size = 0x400, scoped, tag = 'output window, operand 0, single buffered']
    %8 = vsyncpa [#allocation3], 0
    %9 = vsyncpa [#allocation4], 0
    // Predicated region
    $region2: #{circle_classifier.1} parent=1 // pred_check
      _
    $region3: #{circle_classifier.1} parent=1 // pred_check_branch
      %11 = sbr.rel (0) target = $region5
    $region4: #{circle_classifier.1} parent=1 // pred_region
      %s13 = ssub.s32 128, 128
      %14 = vsyncadd [#allocation3], %s13
      %s16 = sshll.u32 [#allocation2], 4
      %s17 = int_to_ptr.vmem [resolvable:$true] %s16
      %19 = dma.hbm_to_vmem [thread:$0]  %s0, 128, %s17, [#allocation3]
    $region5: #{circle_classifier.1} parent=1 // pred_fallthru
      _
    // Predicated region
    $region6: #{circle_classifier.1} parent=1 // pred_check
      _
    $region7: #{circle_classifier.1} parent=1 // pred_check_branch
      %21 = sbr.rel (0) target = $region9
    $region8: #{circle_classifier.1} parent=1 // pred_region
      _
    $region9: #{circle_classifier.1} parent=1 // pred_fallthru
      _
    // Predicated region
    $region10: #{circle_classifier.1} parent=1 // pred_check
      _
    $region11: #{circle_classifier.1} parent=1 // pred_check_branch
      %23 = sbr.rel (0) target = $region13
    $region12: #{circle_classifier.1} parent=1 // pred_region
      _
    $region13: #{circle_classifier.1} parent=1 // pred_fallthru
      _
    // Predicated region
    $region14: #{circle_classifier.1} parent=1 // pred_check
      _
    $region15: #{circle_classifier.1} parent=1 // pred_check_branch
      %25 = sbr.rel (0) target = $region17
    $region16: #{circle_classifier.1} parent=1 // pred_region
      %26 = dma.done [#allocation3], 128
    $region17: #{circle_classifier.1} parent=1 // pred_fallthru
      _
    %v27 = vld [vmem:[#allocation2] sm:$0xff]
    %v28 = vld [vmem:[%s1] sm:$0xff]
    %v29 = vld [vmem:[%s1 + $0x8] sm:$0xff]
    %v30 = vmul.f32 %v28, %v28
    %v31 = vmul.f32 %v29, %v29
    %vm32 = vcmask 261120
    %v33 = vsel %vm32, %v30, 0.0
    %34 = vadd.xlane.f32.xlu0 %v33
    %v35 = vpop.xlane.xlu0 %34
    %v36 = vsel %vm32, %v31, 0.0
    %37 = vadd.xlane.f32.xlu0 %v36
    %v38 = vpop.xlane.xlu0 %37
    %v39 = vmax.f32 %v35, 1e-24
    %v40 = vmax.f32 %v38, 1e-24
    %v41 = vrsqrt.pop %v39
    %v42 = vrsqrt.pop %v40
    %v43 = vmul.f32 %v28, %v41
    %v44 = vmul.f32 %v29, %v42
    %v46 = vsel %vm32, %v27, 0
    %v49 = vsel %vm32, %v43, 0
    %v52 = vsel %vm32, %v44, 0
    %54 = vmatprep.subr.mxu0 0.0
    %55 = vmatpush1.xpose.msra.mxu0 %v49
    %56 = vmatprep.subr.mxu0 0.0
    %57 = vmatpush1.xpose.msra.mxu0 %v52
    %58 = vmatprep.subr.mxu0 0.0
    %59 = vmatpush1.xpose.msra.mxu0 0.0
    %60 = vmatprep.subr.mxu0 0.0
    %61 = vmatpush1.xpose.msra.mxu0 0.0
    %62 = vmatprep.subr.mxu0 0.0
    %63 = vmatpush1.xpose.msra.mxu0 0.0
    %64 = vmatprep.subr.mxu0 0.0
    %65 = vmatpush1.xpose.msra.mxu0 0.0
    %66 = vmatprep.subr.mxu0 0.0
    %67 = vmatpush1.xpose.msra.mxu0 0.0
    %68 = vmatprep.subr.mxu0 0.0
    %69 = vmatpush1.xpose.msra.mxu0 0.0
    %70 = vmatprep.subr.mxu0 0.0
    %71 = vmatpush1.xpose.msra.mxu0 0.0
    %72 = vmatprep.subr.mxu0 0.0
    %73 = vmatpush1.xpose.msra.mxu0 0.0
    %74 = vmatprep.subr.mxu0 0.0
    %75 = vmatpush1.xpose.msra.mxu0 0.0
    %76 = vmatprep.subr.mxu0 0.0
    %77 = vmatpush1.xpose.msra.mxu0 0.0
    %78 = vmatprep.subr.mxu0 0.0
    %79 = vmatpush1.xpose.msra.mxu0 0.0
    %80 = vmatprep.subr.mxu0 0.0
    %81 = vmatpush1.xpose.msra.mxu0 0.0
    %82 = vmatprep.subr.mxu0 0.0
    %83 = vmatpush1.xpose.msra.mxu0 0.0
    %84 = vmatprep.subr.mxu0 0.0
    %85 = vmatpush1.xpose.msra.mxu0 0.0
    %86 = vmatprep.subr.mxu0 0.0
    %87 = vmatpush1.xpose.msra.mxu0 0.0
    %88 = vmatprep.subr.mxu0 0.0
    %89 = vmatpush1.xpose.msra.mxu0 0.0
    %90 = vmatprep.subr.mxu0 0.0
    %91 = vmatpush1.xpose.msra.mxu0 0.0
    %92 = vmatprep.subr.mxu0 0.0
    %93 = vmatpush1.xpose.msra.mxu0 0.0
    %94 = vmatprep.subr.mxu0 0.0
    %95 = vmatpush1.xpose.msra.mxu0 0.0
    %96 = vmatprep.subr.mxu0 0.0
    %97 = vmatpush1.xpose.msra.mxu0 0.0
    %98 = vmatprep.subr.mxu0 0.0
    %99 = vmatpush1.xpose.msra.mxu0 0.0
    %100 = vmatprep.subr.mxu0 0.0
    %101 = vmatpush1.xpose.msra.mxu0 0.0
    %102 = vmatprep.subr.mxu0 0.0
    %103 = vmatpush1.xpose.msra.mxu0 0.0
    %104 = vmatprep.subr.mxu0 0.0
    %105 = vmatpush1.xpose.msra.mxu0 0.0
    %106 = vmatprep.subr.mxu0 0.0
    %107 = vmatpush1.xpose.msra.mxu0 0.0
    %108 = vmatprep.subr.mxu0 0.0
    %109 = vmatpush1.xpose.msra.mxu0 0.0
    %110 = vmatprep.subr.mxu0 0.0
    %111 = vmatpush1.xpose.msra.mxu0 0.0
    %112 = vmatprep.subr.mxu0 0.0
    %113 = vmatpush1.xpose.msra.mxu0 0.0
    %114 = vmatprep.subr.mxu0 0.0
    %115 = vmatpush1.xpose.msra.mxu0 0.0
    %116 = vmatprep.subr.mxu0 0.0
    %117 = vmatpush1.xpose.msra.mxu0 0.0
    %118 = vmatprep.mubr.f32.mxu0 0.0
    %119 = vmatmul.mubr.f32.gmra.mrb[0].mxu0 %v46
    %v120 = vpop.f32.mrb[0].mxu0
    %v121 = vadd.f32 0.0, %v120
    %v122 = vpop.f32.mrb[0].mxu0
    %123 = vdwg.mxu0
    %v124 = vmul.f32 %v27, %v27
    %v125 = vsel %vm32, %v124, 0.0
    %126 = vadd.xlane.f32.xlu0 %v125
    %v127 = vpop.xlane.xlu0 %126
    %v128 = vmax.f32 %v127, 1e-24
    %v129 = vrsqrt.pop %v128
    %v130 = vmul.f32 %v121, %v129
    %v131 = vld [vmem:[%s2] sm:$0xff]
    %v132 = vlaneseq
    %v133 = vand.u32 %v132, 127
    %134 = vset.pattern.permute.xlu0 0
    %135 = vperm.xlu0 %134, %v131
    %v136 = vpop.permute.xlu0 %135
    %vm137 = vcmp.eq.s32.totalorder %v133, %v136
    %v138 = vsel %vm137, %v130, 0.0
    %vm139 = vcmask 130048
    %v140 = vsel %vm139, %v138, 0.0
    %141 = vadd.xlane.f32.xlu0 %v140
    %v142 = vpop.xlane.xlu0 %141
    %v143 = vsub.f32 0.0, %v142
    %v144 = vadd.f32 %v143, 1.0
    %v145 = vadd.f32 %v144, 0.25
    %v146 = vmax.f32 %v145, 0.0
    %v147 = vsub.f32 0.0, %v146
    %v148 = vsub.f32 %v142, 0.75
    %v149 = vmul.f32 %v147, %v148
    %v150 = vmul.f32 %v149, 64.0
    %v151 = vadd.f32 %v130, 0.25
    %v152 = vmax.f32 %v151, 0.0
    %v153 = vsub.f32 %v130, 0.25
    %v154 = vmul.f32 %v152, %v153
    %v155 = vmul.f32 %v154, 64.0
    %v156 = vsel %vm137, -1e+30, %v155
    %v157 = vsel %vm139, %v156, -inf
    %158 = vmax.xlane.f32.xlu0 %v157
    %v159 = vpop.xlane.xlu0 %158
    %v160 = vsub.f32 %v156, %v159
    %v161 = vmul.f32 %v160, 1.442695
    %v162 = vpow.pop %v161
    %v163 = vsel %vm139, %v162, 0.0
    %164 = vadd.xlane.f32.xlu0 %v163
    %v165 = vpop.xlane.xlu0 %164
    %v166 = vlog2.pop %v165
    %v167 = vmul.f32 %v166, 0.6931472
    %v168 = vadd.f32 %v159, %v167
    %v169 = vadd.f32 %v168, %v150
    %v170 = vmax.f32 %v169, 0.0
    %v171 = vand.u32 2147483647, %v169
    %v172 = vsub.f32 0.0, %v171
    %v173 = vmul.f32 %v172, 1.442695
    %v174 = vpow.pop %v173
    %v175 = vadd.f32 %v174, 1.0
    %v176 = vlog2.pop %v175
    %v177 = vmul.f32 %v176, 0.6931472
    %v178 = vmul.f32 -0.5, %v174
    %v179 = vadd.f32 %v178, 1.0
    %v180 = vmul.f32 %v179, %v174
    %v181 = vand.u32 2147483647, %v174
    %vm182 = vcmp.lt.f32.partialorder %v181, 0.0004427343
    %v183 = vsel %vm182, %v180, %v177
    %v184 = vadd.f32 %v170, %v183
    %v185 = vrot.slane %v184, 4
    %v186 = vadd.f32 %v184, %v185
    %v187 = vrot.slane %v186, 2
    %v188 = vadd.f32 %v186, %v187
    %v189 = vrot.slane %v188, 1
    %v190 = vadd.f32 %v188, %v189
    %v191 = vmul.f32 %v190, 0.125
    %vm192 = vcmask 0
    %193 = vst.msk [vmem:[#allocation5] sm:$0x1] %vm192, %v191
    // Predicated region
    $region18: #{circle_classifier.1} parent=1 // pred_check
      _
    $region19: #{circle_classifier.1} parent=1 // pred_check_branch
      %195 = sbr.rel (0) target = $region21
    $region20: #{circle_classifier.1} parent=1 // pred_region
      %s197 = ssub.s32 16, 16
      %198 = vsyncadd [#allocation4], %s197
      %s200 = sshll.u32 [#allocation5], 4
      %s201 = int_to_ptr.vmem [resolvable:$true] %s200
      %203 = dma.vmem_to_hbm [thread:$0]  %s201, 16, %s3, [#allocation4]
    $region21: #{circle_classifier.1} parent=1 // pred_fallthru
      _
    // Predicated region
    $region22: #{circle_classifier.1} parent=1 // pred_check
      _
    $region23: #{circle_classifier.1} parent=1 // pred_check_branch
      %205 = sbr.rel (0) target = $region25
    $region24: #{circle_classifier.1} parent=1 // pred_region
      %206 = dma.done [#allocation4], 16
    $region25: #{circle_classifier.1} parent=1 // pred_fallthru
      _
    %207 = vsyncpa [#allocation3], 1
    %208 = vsyncpa [#allocation4], 1

</llo_original>
